<compile_context>
chip_gen: v5e
topology: v5e:2x2
jax: 0.10.0
libtpu: 0.0.40
codegen_flags: <defaults>
</compile_context>

<pallas_src>
import functools

import jax
import jax.numpy as jnp
from jax import lax
from jax.experimental import pallas as pl
from jax.experimental.pallas import tpu as pltpu

LANE = 128
SUBLANE = 8


def _row_sum_kernel(x_ref, s_ref, *, col_tile, valid_cols):
    # x_ref: (R, T) tile; s_ref: (R, 1) f32 accumulator, resident across the
    # column-tile grid axis (output index_map returns the same block for all t).
    @pl.when(pl.program_id(1) == 0)
    def _():
        s_ref[...] = jnp.zeros_like(s_ref)

    x = x_ref[...].astype(jnp.float32)
    if valid_cols is not None:  # static: last column tile is partial -> mask it
        col = pl.program_id(1) * col_tile + lax.broadcasted_iota(
            jnp.int32, x.shape, 1)
        x = jnp.where(col < valid_cols, x, 0.0)
    s_ref[...] += jnp.sum(x, axis=1, keepdims=True)


def _scale_kernel(x_ref, y_ref, o_ref):
    # x_ref/o_ref: (R, T); y_ref: (R, 1) f32 gate broadcast over lanes.
    o_ref[...] = (x_ref[...] * y_ref[...]).astype(o_ref.dtype)


def _pick_tiles(rows, hw, itemsize, target_block_bytes, max_rows_per_block):
    """Row tile (multiple of 8 or full) and column tile (multiple of 128 or full)."""
    r = min(pl.cdiv(rows, SUBLANE) * SUBLANE, max_rows_per_block)
    if r >= rows:
        r = rows  # full dim -> always a legal block shape
    budget_lanes = max(LANE, (target_block_bytes // (r * itemsize)) // LANE * LANE)
    t = hw if budget_lanes >= hw else budget_lanes  # full dim or multiple of 128
    return r, t


def ca_layer(x, w1, b1, w2, b2, *,
             target_block_bytes=2 << 20, max_rows_per_block=256):
    """Channel attention.  x: (B,C,H,W); w1: (4,C); b1: (4,); w2: (C,4); b2: (C,)."""
    B, C, H, W = x.shape
    HW = H * W
    rows = B * C
    itemsize = jnp.dtype(x.dtype).itemsize

    x2 = x.reshape(rows, HW)
    R, T = _pick_tiles(rows, HW, itemsize, target_block_bytes, max_rows_per_block)
    n_r = pl.cdiv(rows, R)
    n_t = pl.cdiv(HW, T)

    # ---- pass 1: per-(B,C) spatial sums (tiled Pallas reduction) ----
    sum_cost = pl.CostEstimate(
        flops=rows * HW,
        transcendentals=0,
        bytes_accessed=rows * HW * itemsize + rows * 4,
    )
    sums = pl.pallas_call(
        functools.partial(
            _row_sum_kernel,
            col_tile=T,
            valid_cols=None if HW % T == 0 else HW),
        out_shape=jax.ShapeDtypeStruct((rows, 1), jnp.float32),
        grid_spec=pltpu.PrefetchScalarGridSpec(
            num_scalar_prefetch=0,
            grid=(n_r, n_t),
            in_specs=[pl.BlockSpec((R, T), lambda r, t: (r, t))],
            out_specs=pl.BlockSpec((R, 1), lambda r, t: (r, 0)),
        ),
        compiler_params=pltpu.CompilerParams(
            dimension_semantics=("parallel", "arbitrary")),
        cost_estimate=sum_cost,
    )(x2)

    # ---- gate: tiny C->4->C MLP + sigmoid on B*C floats (plain JAX/XLA) ----
    mean = sums[:, 0].reshape(B, C).astype(jnp.float32) / jnp.float32(HW)
    h = mean @ w1.astype(jnp.float32).T + b1.astype(jnp.float32)[None, :]
    h = jnp.where(h >= 0, h, 0.1 * h)                       # LeakyReLU(0.1)
    g = h @ w2.astype(jnp.float32).T + b2.astype(jnp.float32)[None, :]
    y2 = jax.nn.sigmoid(g).reshape(rows, 1)                 # (B*C, 1) f32

    # ---- pass 2: out = x * y, tiled over (rows, cols), both axes parallel ----
    scale_cost = pl.CostEstimate(
        flops=rows * HW,
        transcendentals=0,
        bytes_accessed=2 * rows * HW * itemsize + rows * 4,
    )
    out2 = pl.pallas_call(
        _scale_kernel,
        out_shape=jax.ShapeDtypeStruct((rows, HW), x.dtype),
        grid_spec=pltpu.PrefetchScalarGridSpec(
            num_scalar_prefetch=0,
            grid=(n_r, n_t),
            in_specs=[
                pl.BlockSpec((R, T), lambda r, t: (r, t)),
                pl.BlockSpec((R, 1), lambda r, t: (r, 0)),
            ],
            out_specs=pl.BlockSpec((R, T), lambda r, t: (r, t)),
        ),
        compiler_params=pltpu.CompilerParams(
            dimension_semantics=("parallel", "parallel")),
        cost_estimate=scale_cost,
    )(x2, y2)

    return out2.reshape(B, C, H, W)


def ca_layer_ref(x, w1, b1, w2, b2):
    """Pure-JAX reference matching the PyTorch module."""
    m = jnp.mean(x, axis=(2, 3), keepdims=True)             # (B,C,1,1)
    h = jnp.einsum('oc,bcij->boij', w1, m) + b1[None, :, None, None]
    h = jnp.where(h >= 0, h, 0.1 * h)
    y = jnp.einsum('co,boij->bcij', w2, h) + b2[None, :, None, None]
    return x * jax.nn.sigmoid(y)


if __name__ == "__main__":
    key = jax.random.PRNGKey(0)

    def run_case(B, C, H, W, case_key, **kw):
        kx, kw1, kb1, kw2, kb2 = jax.random.split(case_key, 5)
        x = jax.random.normal(kx, (B, C, H, W), dtype=jnp.float32)
        # Conv2d(C,4,1) / Conv2d(4,C,1) weights with the 1x1 spatial dims squeezed.
        w1 = jax.random.normal(kw1, (4, C), dtype=jnp.float32) * 0.1
        b1 = jax.random.normal(kb1, (4,), dtype=jnp.float32) * 0.1
        w2 = jax.random.normal(kw2, (C, 4), dtype=jnp.float32) * 0.1
        b2 = jax.random.normal(kb2, (C,), dtype=jnp.float32) * 0.1

        out = jax.block_until_ready(ca_layer(x, w1, b1, w2, b2, **kw))
        ref = ca_layer_ref(x, w1, b1, w2, b2)
        assert out.shape == (B, C, H, W)
        assert jnp.allclose(out, ref, atol=1e-5, rtol=1e-5), \
            f"mismatch vs reference for shape {(B, C, H, W)}"

    k1, k2, k3, k4 = jax.random.split(key, 4)
    run_case(2, 4, 16, 16, k1)                 # primary: lane-dense, single block
    run_case(2, 32, 16, 16, k2)                # more channels, still one block
    run_case(2, 4, 10, 10, k3)                 # HW=100 -> full-dim lane block
    run_case(5, 4, 12, 12, k4,                 # force tiling: partial row & col
             target_block_bytes=4096, max_rows_per_block=8)

    print("KERNEL_OK")
</pallas_src>

<mosaic_0001>
module attributes {stable_mosaic.version = 11 : i64} {
  func.func @_row_sum_kernel(%arg0: i32, %arg1: i32, %arg2: memref<8x256xf32, #tpu.memory_space<vmem>>, %arg3: memref<8x1xf32, #tpu.memory_space<vmem>>) attributes {dimension_semantics = [#tpu.dimension_semantics<parallel>, #tpu.dimension_semantics<arbitrary>], iteration_bounds = array<i64: 1, 1>, scalar_prefetch = 0 : i64, scratch_operands = 0 : i64, tpu.core_type = #tpu.core_type<tc>, window_params = [{transform_indices = @transform_0, window_bounds = array<i64: 8, 256>}, {transform_indices = @transform_1, window_bounds = array<i64: 8, 1>}]} {
    %c0_i32 = arith.constant 0 : i32
    %0 = arith.cmpi eq, %arg1, %c0_i32 : i32
    %1 = arith.extui %0 : i1 to i32
    %c0_i32_0 = arith.constant 0 : i32
    %2 = arith.cmpi ne, %1, %c0_i32_0 : i32
    scf.if %2 {
      %cst_6 = arith.constant 0.000000e+00 : f32
      %9 = vector.broadcast %cst_6 : f32 to vector<8x1xf32>
      %c0_7 = arith.constant 0 : index
      %c0_8 = arith.constant 0 : index
      %10 = vector.load %arg3[%c0_7, %c0_8] : memref<8x1xf32, #tpu.memory_space<vmem>>, vector<8x1xf32>
      tpu.vector_store %arg3[%c0_7, %c0_8], %9 {strides = array<i32>} : memref<8x1xf32, #tpu.memory_space<vmem>>, vector<8x1xf32>,
    } else {
    }
    %c0 = arith.constant 0 : index
    %c0_1 = arith.constant 0 : index
    %3 = vector.load %arg2[%c0, %c0_1] : memref<8x256xf32, #tpu.memory_space<vmem>>, vector<8x256xf32>
    %c0_2 = arith.constant 0 : index
    %c0_3 = arith.constant 0 : index
    %4 = vector.load %arg3[%c0_2, %c0_3] : memref<8x1xf32, #tpu.memory_space<vmem>>, vector<8x1xf32>
    %cst = arith.constant dense<0.000000e+00> : vector<8xf32>
    %5 = vector.multi_reduction <add>, %3, %cst [1] : vector<8x256xf32> to vector<8xf32>
    %6 = vector.shape_cast %5 : vector<8xf32> to vector<8x1xf32>
    %7 = arith.addf %4, %6 : vector<8x1xf32>
    %c0_4 = arith.constant 0 : index
    %c0_5 = arith.constant 0 : index
    %8 = vector.load %arg3[%c0_4, %c0_5] : memref<8x1xf32, #tpu.memory_space<vmem>>, vector<8x1xf32>
    tpu.vector_store %arg3[%c0_4, %c0_5], %7 {strides = array<i32>} : memref<8x1xf32, #tpu.memory_space<vmem>>, vector<8x1xf32>,
    return
  }
  func.func @transform_0(%arg0: i32, %arg1: i32) -> (i32, i32) {
    %c0_i32 = arith.constant 0 : i32
    return %arg0, %arg1 : i32, i32
  }
  func.func @transform_1(%arg0: i32, %arg1: i32) -> (i32, i32) {
    %c0_i32 = arith.constant 0 : i32
    %c0_i32_0 = arith.constant 0 : i32
    return %arg0, %c0_i32 : i32, i32
  }
}

</mosaic_0001>

<llo_original>
// kernel: tpu_custom_call.1
$region0: #{tpu_custom_call.1}
  #allocation0 [shape = 'u32[]', space=smem, size = 0x4, offset = 0x4, fixed_abs, tag = 'smem constant byte address 0x4 - core index']
  #allocation1 [shape = 'u32[72,128]{1,0:T(1,128)}', space=vmem, size = 0x9000, scoped, tag = 'internal scratch']
  %s0 = inlined_call_operand.hbm [shape: f32[8,256], index: 0, kind: input, shape index: {}]
  %s1 = inlined_call_operand.vmem [shape: f32[8,1], index: 1, kind: output, shape index: {}]
  %s2 = sld [smem:[#allocation0]]
  $region22: #{tpu_custom_call.1} parent=0
    _
  %s4 = ssub.s32 1, %s2
  %s5 = scalar_select 0, %s4, %s2
  $region1: #{tpu_custom_call.1} parent=0
    #allocation2 [shape = 'u8[8192]{0}', space=vmem, size = 0x2000, scoped, tag = 'input window, operand 0, single buffered']
    #allocation3 [shape = 's32[1]{0}', space=sflag, size = 0x4, scoped, tag = 'scoped memory for tpu_custom_call.1']
    %6 = vsyncpa [#allocation3], 0
    // Predicated region
    $region2: #{tpu_custom_call.1} parent=1 // pred_check
      _
    $region3: #{tpu_custom_call.1} parent=1 // pred_check_branch
      %8 = sbr.rel (0) target = $region5
    $region4: #{tpu_custom_call.1} parent=1 // pred_region
      %10 = vsyncadd [#allocation3], 0
      %s12 = sshll.u32 %s0, 4
      %s13 = int_to_ptr.hbm [resolvable:$true] %s12
      %s14 = sshll.u32 [#allocation2], 4
      %s15 = int_to_ptr.vmem [resolvable:$true] %s14
      %17 = dma.hbm_to_vmem [thread:$0]  %s13, 256, %s15, [#allocation3]
    $region5: #{tpu_custom_call.1} parent=1 // pred_fallthru
      _
    // Predicated region
    $region6: #{tpu_custom_call.1} parent=1 // pred_check
      _
    $region7: #{tpu_custom_call.1} parent=1 // pred_check_branch
      %19 = sbr.rel (0) target = $region9
    $region8: #{tpu_custom_call.1} parent=1 // pred_region
      %21 = dma.done [#allocation3], 256
    $region9: #{tpu_custom_call.1} parent=1 // pred_fallthru
      _
    %p22 = scmp.eq.s32.totalorder 0, 0
    // Predicated region
    $region10: #{tpu_custom_call.1} parent=1 // pred_check
      %p23 = pneg %p22
    $region11: #{tpu_custom_call.1} parent=1 // pred_check_branch
      %25 = sbr.rel (%p23) target = $region13
    $region12: #{tpu_custom_call.1} parent=1 // pred_region
      %vm26 = vcmask 7168
      %27 = vst.msk [vmem:[%s1] sm:$0xff] %vm26, 0.0
    $region13: #{tpu_custom_call.1} parent=1 // pred_fallthru
      _
    %v28 = vld [vmem:[#allocation2] sm:$0xff]
    %v29 = vld [vmem:[#allocation2 + $0x8] sm:$0xff]
    %v30 = vld [vmem:[%s1] sm:$0xff]
    %v31 = vadd.f32 %v28, %v29
    %32 = vadd.xlane.f32.xlu0 %v31
    %v33 = vpop.xlane.xlu0 %32
    %v34 = vadd.f32 %v30, %v33
    %vm35 = vcmask 7168
    %36 = vst.msk [vmem:[%s1] sm:$0xff] %vm35, %v34
    // Predicated region
    $region14: #{tpu_custom_call.1} parent=1 // pred_check
      _
    $region15: #{tpu_custom_call.1} parent=1 // pred_check_branch
      %38 = sbr.rel (0) target = $region17
    $region16: #{tpu_custom_call.1} parent=1 // pred_region
      _
    $region17: #{tpu_custom_call.1} parent=1 // pred_fallthru
      _
    // Predicated region
    $region18: #{tpu_custom_call.1} parent=1 // pred_check
      _
    $region19: #{tpu_custom_call.1} parent=1 // pred_check_branch
      %40 = sbr.rel (0) target = $region21
    $region20: #{tpu_custom_call.1} parent=1 // pred_region
      _
    $region21: #{tpu_custom_call.1} parent=1 // pred_fallthru
      _
    %41 = vsyncpa [#allocation3], 1

</llo_original>
